<compile_context>
chip_gen: v7x
topology: tpu7x:2x2x1
jax: 0.10.0
libtpu: 0.0.40
codegen_flags: <defaults>
</compile_context>

<pallas_src>
import math

import jax
import jax.numpy as jnp
from jax import lax
from jax.experimental import pallas as pl
from jax.experimental.pallas import tpu as pltpu

N_EMBD = 128
N_HEAD = 4
HEAD_DIM = N_EMBD // N_HEAD  # 32


def _attn_kernel(x_ref, w_attn_ref, b_attn_ref, w_proj_ref, b_proj_ref, o_ref):
    # x_ref: (Bt, T, C); w_attn: (C, 3C) bf16 (q cols pre-scaled); b_attn: (1, 3C) f32;
    # w_proj: (C, C) bf16; b_proj: (1, C) f32; o_ref: (Bt, T, C) (same dtype as x).
    Bt, T, C = x_ref.shape
    D = HEAD_DIM
    M = Bt * T

    # Fold batch into the M dimension for the projection matmuls.
    x = x_ref[...].reshape(M, C).astype(jnp.bfloat16)

    # QKV projection: bf16 operands, f32 accumulation on the MXU.
    # The 1/sqrt(D) attention scale is already folded into the q columns.
    qkv = jnp.dot(x, w_attn_ref[...], preferred_element_type=jnp.float32)
    qkv = qkv + b_attn_ref[...]                                  # (M, 3C) f32

    # Causal mask, hoisted out of the head loop. row = query idx, col = key idx.
    row = lax.broadcasted_iota(jnp.int32, (T, T), 0)
    col = lax.broadcasted_iota(jnp.int32, (T, T), 1)
    causal = (row >= col)[None]                                  # (1, T, T)
    big_neg = jnp.float32(-1e30)  # finite: no NaN risk even for fully-masked rows

    # Per-head attention core (Bt-batched dot_generals, no k transpose).
    y_heads = []
    for h in range(N_HEAD):
        qh = qkv[:, h * D:(h + 1) * D].reshape(Bt, T, D).astype(jnp.bfloat16)
        kh = qkv[:, C + h * D:C + (h + 1) * D].reshape(Bt, T, D).astype(jnp.bfloat16)
        vh = qkv[:, 2 * C + h * D:2 * C + (h + 1) * D].reshape(Bt, T, D).astype(jnp.bfloat16)

        # Scores: contract over D with a batch dim over Bt.
        att = lax.dot_general(
            qh, kh, dimension_numbers=(((2,), (2,)), ((0,), (0,))),
            preferred_element_type=jnp.float32)                  # (Bt, T, T)
        att = jnp.where(causal, att, big_neg)

        # Numerically stable softmax; stats stay f32 (no bf16 VPU on v5e).
        att_max = jnp.max(att, axis=-1, keepdims=True)
        p = jnp.exp(att - att_max)
        denom = jnp.sum(p, axis=-1, keepdims=True)
        p = p * pl.reciprocal(denom, approx=True)

        # P @ V, batched over Bt.
        yh = lax.dot_general(
            p.astype(jnp.bfloat16), vh,
            dimension_numbers=(((2,), (1,)), ((0,), (0,))),
            preferred_element_type=jnp.float32)                  # (Bt, T, D) f32
        y_heads.append(yh)

    # Merge heads along lanes and do ONE K=128 output projection
    # (instead of 4 padded K=32 MXU pushes).
    y = jnp.concatenate(y_heads, axis=-1).reshape(M, C)          # (M, C) f32
    out = jnp.dot(y.astype(jnp.bfloat16), w_proj_ref[...],
                  preferred_element_type=jnp.float32)
    out = out + b_proj_ref[...]                                  # (M, C) f32

    # TODO(synk): attn_dropout / resid_dropout are identity (eval semantics).
    o_ref[...] = out.reshape(Bt, T, C).astype(o_ref.dtype)


def _vmem_limit_bytes():
    try:
        cap = int(pltpu.get_tpu_info().vmem_capacity_bytes)
    except Exception:
        cap = 128 * 1024 * 1024
    # Leave headroom: ~48 MiB on v7x (64 MiB physical), ~96-100 MiB on v5e/v6e.
    return min(100 * 1024 * 1024, (3 * cap) // 4)


def _step_vmem_estimate(Bt, T, C, in_bytes, out_bytes):
    M = Bt * T
    est = 2 * Bt * T * C * in_bytes              # x double-buffer
    est += 2 * Bt * T * C * out_bytes            # out double-buffer
    est += M * 3 * C * (4 + 2)                   # qkv f32 + bf16 head slices
    est += 3 * Bt * T * T * 4 + Bt * T * T * 2   # live score / exp / prob tiles
    est += 2 * M * C * 4                         # merged head output + proj acc
    est += (C * 3 * C + C * C) * 2               # resident bf16 weights
    return est


def _pick_block_batch(B, T, C, in_bytes, out_bytes, vmem_limit):
    # Aim for ~2048 rows per grid step (amortizes ~0.35us/step overhead, feeds
    # the MXU), bounded by a VMEM budget, constrained to a divisor of B.
    ROW_TARGET = 2048
    bt = min(B, max(1, ROW_TARGET // T))
    while B % bt:
        bt -= 1
    budget = int(0.6 * vmem_limit)
    while bt > 1 and _step_vmem_estimate(bt, T, C, in_bytes, out_bytes) > budget:
        bt -= 1
        while B % bt:
            bt -= 1
    # Keep >= 2 grid steps when possible so the "parallel" axis can shard over
    # the two TensorCores on v7x (cost on v5e/v6e is one extra ~0.35us step).
    if bt == B and B > 1:
        bt = B // 2
        while B % bt:
            bt -= 1
    return bt


def causal_self_attention(x, w_attn, b_attn, w_proj, b_proj, *, block_batch=None):
    """x: (B, T, C). w_attn: (C, 3C), b_attn: (3C,), w_proj: (C, C), b_proj: (C,).

    Weights are (in, out) layout (already transposed from PyTorch's (out, in)).
    Output dtype matches x (pass bf16 activations to halve HBM traffic).
    """
    B, T, C = x.shape
    assert C == N_EMBD

    vmem_limit = _vmem_limit_bytes()
    act_bytes = jnp.dtype(x.dtype).itemsize
    if block_batch is None:
        block_batch = _pick_block_batch(B, T, C, act_bytes, act_bytes, vmem_limit)
    Bt = block_batch
    assert B % Bt == 0

    # Fold 1/sqrt(D) into the q columns (and q bias) once, then cast weights to
    # bf16 (halves weight DMA / VMEM footprint; accumulation stays f32 in-kernel).
    scale = 1.0 / math.sqrt(HEAD_DIM)
    w_attn_p = w_attn.astype(jnp.float32).at[:, :C].multiply(scale)
    b_attn_p = b_attn.astype(jnp.float32).at[:C].multiply(scale)
    w_attn_bf = w_attn_p.astype(jnp.bfloat16)
    w_proj_bf = w_proj.astype(jnp.bfloat16)
    b_attn2 = b_attn_p.reshape(1, 3 * C)
    b_proj2 = b_proj.reshape(1, C).astype(jnp.float32)

    return pl.pallas_call(
        _attn_kernel,
        out_shape=jax.ShapeDtypeStruct((B, T, C), x.dtype),
        grid_spec=pltpu.PrefetchScalarGridSpec(
            num_scalar_prefetch=0,
            grid=(B // Bt,),
            in_specs=[
                pl.BlockSpec((Bt, T, C), lambda b: (b, 0, 0)),       # x
                pl.BlockSpec((C, 3 * C), lambda b: (0, 0)),          # w_attn (bf16)
                pl.BlockSpec((1, 3 * C), lambda b: (0, 0)),          # b_attn (f32)
                pl.BlockSpec((C, C), lambda b: (0, 0)),              # w_proj (bf16)
                pl.BlockSpec((1, C), lambda b: (0, 0)),              # b_proj (f32)
            ],
            out_specs=pl.BlockSpec((Bt, T, C), lambda b: (b, 0, 0)),
        ),
        compiler_params=pltpu.CompilerParams(
            dimension_semantics=("parallel",),
            vmem_limit_bytes=vmem_limit,
        ),
    )(x, w_attn_bf, b_attn2, w_proj_bf, b_proj2)


def _reference(x, w_attn, b_attn, w_proj, b_proj):
    """Pure-JAX f32 reference mirroring the PyTorch forward (eval mode)."""
    B, T, C = x.shape
    H, D = N_HEAD, HEAD_DIM
    qkv = x @ w_attn + b_attn                              # (B, T, 3C)
    q, k, v = jnp.split(qkv, 3, axis=-1)
    q = q.reshape(B, T, H, D).transpose(0, 2, 1, 3)
    k = k.reshape(B, T, H, D).transpose(0, 2, 1, 3)
    v = v.reshape(B, T, H, D).transpose(0, 2, 1, 3)
    att = jnp.einsum("bhtd,bhsd->bhts", q, k) / math.sqrt(D)
    mask = jnp.tril(jnp.ones((T, T), dtype=bool))
    att = jnp.where(mask[None, None], att, -jnp.inf)
    att = jax.nn.softmax(att, axis=-1)
    y = jnp.einsum("bhts,bhsd->bhtd", att, v)
    y = y.transpose(0, 2, 1, 3).reshape(B, T, C)
    return y @ w_proj + b_proj


if __name__ == "__main__":
    key = jax.random.PRNGKey(0)
    k_x, k_wa, k_ba, k_wp, k_bp = jax.random.split(key, 5)

    B, T, C = 2, 8, N_EMBD

    # bf16 activations in / out (halves the recurring HBM traffic).
    x = jax.random.normal(k_x, (B, T, C), dtype=jnp.float32).astype(jnp.bfloat16)

    # Deterministic parameters (shapes match nn.Linear(128, 384) / (128, 128)),
    # stored pre-transposed as (in, out).
    w_attn = 0.02 * jax.random.normal(k_wa, (C, 3 * C), dtype=jnp.float32)
    b_attn = 0.02 * jax.random.normal(k_ba, (3 * C,), dtype=jnp.float32)
    w_proj = 0.02 * jax.random.normal(k_wp, (C, C), dtype=jnp.float32)
    b_proj = 0.02 * jax.random.normal(k_bp, (C,), dtype=jnp.float32)

    out = causal_self_attention(x, w_attn, b_attn, w_proj, b_proj)
    out = jax.block_until_ready(out)

    ref = _reference(x.astype(jnp.float32), w_attn, b_attn, w_proj, b_proj)
    assert out.shape == (B, T, C)
    assert out.dtype == x.dtype
    err = float(jnp.max(jnp.abs(out.astype(jnp.float32) - ref)))
    assert err < 3e-2, f"mismatch vs JAX reference: max abs err = {err}"

    print("KERNEL_OK")
</pallas_src>

<mosaic_0001>
module attributes {stable_mosaic.version = 11 : i64} {
  func.func @_attn_kernel(%arg0: i32, %arg1: memref<1x8x128xbf16, #tpu.memory_space<vmem>>, %arg2: memref<128x384xbf16, #tpu.memory_space<vmem>>, %arg3: memref<1x384xf32, #tpu.memory_space<vmem>>, %arg4: memref<128x128xbf16, #tpu.memory_space<vmem>>, %arg5: memref<1x128xf32, #tpu.memory_space<vmem>>, %arg6: memref<1x8x128xbf16, #tpu.memory_space<vmem>>) attributes {dimension_semantics = [#tpu.dimension_semantics<parallel>], iteration_bounds = array<i64: 2>, scalar_prefetch = 0 : i64, scratch_operands = 0 : i64, tpu.core_type = #tpu.core_type<tc>, window_params = [{transform_indices = @transform_0, window_bounds = array<i64: 1, 8, 128>}, {pipeline_mode = #tpu.pipeline_mode<synchronous>, transform_indices = @transform_1, window_bounds = array<i64: 128, 384>}, {pipeline_mode = #tpu.pipeline_mode<synchronous>, transform_indices = @transform_2, window_bounds = array<i64: 1, 384>}, {pipeline_mode = #tpu.pipeline_mode<synchronous>, transform_indices = @transform_3, window_bounds = array<i64: 128, 128>}, {pipeline_mode = #tpu.pipeline_mode<synchronous>, transform_indices = @transform_4, window_bounds = array<i64: 1, 128>}, {transform_indices = @transform_5, window_bounds = array<i64: 1, 8, 128>}]} {
    %c0 = arith.constant 0 : index
    %c0_0 = arith.constant 0 : index
    %c0_1 = arith.constant 0 : index
    %0 = vector.load %arg1[%c0, %c0_0, %c0_1] : memref<1x8x128xbf16, #tpu.memory_space<vmem>>, vector<1x8x128xbf16>
    %1 = vector.shape_cast %0 : vector<1x8x128xbf16> to vector<8x128xbf16>
    %c0_2 = arith.constant 0 : index
    %c0_3 = arith.constant 0 : index
    %2 = vector.load %arg2[%c0_2, %c0_3] : memref<128x384xbf16, #tpu.memory_space<vmem>>, vector<128x384xbf16>
    %cst = arith.constant dense<0.000000e+00> : vector<8x384xf32>
    %3 = tpu.matmul %1, %2, %cst {dimension_numbers = #tpu.dot_dimension_numbers<[1], [0], [0], [1], [0, 0, 1, 1], [], []>} : vector<8x128xbf16>, vector<128x384xbf16>, vector<8x384xf32> -> vector<8x384xf32>
    %c0_4 = arith.constant 0 : index
    %c0_5 = arith.constant 0 : index
    %4 = vector.load %arg3[%c0_4, %c0_5] : memref<1x384xf32, #tpu.memory_space<vmem>>, vector<1x384xf32>
    %5 = vector.broadcast %4 : vector<1x384xf32> to vector<8x384xf32>
    %6 = arith.addf %3, %5 : vector<8x384xf32>
    %7 = tpu.iota {dimensions = array<i32: 0>} : vector<8x8xi32>
    %8 = tpu.iota {dimensions = array<i32: 1>} : vector<8x8xi32>
    %9 = arith.cmpi sge, %7, %8 : vector<8x8xi32>
    %10 = vector.shape_cast %9 : vector<8x8xi1> to vector<1x8x8xi1>
    %11 = vector.extract_strided_slice %6 {offsets = [0, 0], sizes = [8, 32], strides = [1, 1]} : vector<8x384xf32> to vector<8x32xf32>
    %12 = vector.shape_cast %11 : vector<8x32xf32> to vector<1x8x32xf32>
    %13 = arith.truncf %12 : vector<1x8x32xf32> to vector<1x8x32xbf16>
    %14 = vector.extract_strided_slice %6 {offsets = [0, 128], sizes = [8, 32], strides = [1, 1]} : vector<8x384xf32> to vector<8x32xf32>
    %15 = vector.shape_cast %14 : vector<8x32xf32> to vector<1x8x32xf32>
    %16 = arith.truncf %15 : vector<1x8x32xf32> to vector<1x8x32xbf16>
    %17 = vector.extract_strided_slice %6 {offsets = [0, 256], sizes = [8, 32], strides = [1, 1]} : vector<8x384xf32> to vector<8x32xf32>
    %18 = vector.shape_cast %17 : vector<8x32xf32> to vector<1x8x32xf32>
    %19 = arith.truncf %18 : vector<1x8x32xf32> to vector<1x8x32xbf16>
    %cst_6 = arith.constant dense<0.000000e+00> : vector<1x8x8xf32>
    %20 = tpu.matmul %13, %16, %cst_6 {dimension_numbers = #tpu.dot_dimension_numbers<[2], [2], [1], [1], [0, 0, 0, 1, 1, 1], [0], [0]>} : vector<1x8x32xbf16>, vector<1x8x32xbf16>, vector<1x8x8xf32> -> vector<1x8x8xf32>
    %cst_7 = arith.constant -1.000000e+30 : f32
    %21 = vector.broadcast %cst_7 : f32 to vector<1x8x8xf32>
    %22 = arith.select %10, %20, %21 : vector<1x8x8xi1>, vector<1x8x8xf32>
    %cst_8 = arith.constant dense<0xFF800000> : vector<1x8xf32>
    %23 = vector.multi_reduction <maximumf>, %22, %cst_8 [2] : vector<1x8x8xf32> to vector<1x8xf32>
    %24 = vector.shape_cast %23 : vector<1x8xf32> to vector<1x8x1xf32>
    %25 = vector.broadcast %24 : vector<1x8x1xf32> to vector<1x8x8xf32>
    %26 = arith.subf %22, %25 : vector<1x8x8xf32>
    %27 = math.exp %26 : vector<1x8x8xf32>
    %cst_9 = arith.constant dense<0.000000e+00> : vector<1x8xf32>
    %28 = vector.multi_reduction <add>, %27, %cst_9 [2] : vector<1x8x8xf32> to vector<1x8xf32>
    %29 = vector.shape_cast %28 : vector<1x8xf32> to vector<1x8x1xf32>
    %30 = tpu.reciprocal %29 {approx = true} : vector<1x8x1xf32> -> vector<1x8x1xf32>
    %31 = vector.broadcast %30 : vector<1x8x1xf32> to vector<1x8x8xf32>
    %32 = arith.mulf %27, %31 : vector<1x8x8xf32>
    %33 = arith.truncf %32 : vector<1x8x8xf32> to vector<1x8x8xbf16>
    %cst_10 = arith.constant dense<0.000000e+00> : vector<1x8x32xf32>
    %34 = tpu.matmul %33, %19, %cst_10 {dimension_numbers = #tpu.dot_dimension_numbers<[2], [1], [1], [2], [0, 0, 0, 1, 1, 2], [0], [0]>} : vector<1x8x8xbf16>, vector<1x8x32xbf16>, vector<1x8x32xf32> -> vector<1x8x32xf32>
    %35 = vector.extract_strided_slice %6 {offsets = [0, 32], sizes = [8, 32], strides = [1, 1]} : vector<8x384xf32> to vector<8x32xf32>
    %36 = vector.shape_cast %35 : vector<8x32xf32> to vector<1x8x32xf32>
    %37 = arith.truncf %36 : vector<1x8x32xf32> to vector<1x8x32xbf16>
    %38 = vector.extract_strided_slice %6 {offsets = [0, 160], sizes = [8, 32], strides = [1, 1]} : vector<8x384xf32> to vector<8x32xf32>
    %39 = vector.shape_cast %38 : vector<8x32xf32> to vector<1x8x32xf32>
    %40 = arith.truncf %39 : vector<1x8x32xf32> to vector<1x8x32xbf16>
    %41 = vector.extract_strided_slice %6 {offsets = [0, 288], sizes = [8, 32], strides = [1, 1]} : vector<8x384xf32> to vector<8x32xf32>
    %42 = vector.shape_cast %41 : vector<8x32xf32> to vector<1x8x32xf32>
    %43 = arith.truncf %42 : vector<1x8x32xf32> to vector<1x8x32xbf16>
    %cst_11 = arith.constant dense<0.000000e+00> : vector<1x8x8xf32>
    %44 = tpu.matmul %37, %40, %cst_11 {dimension_numbers = #tpu.dot_dimension_numbers<[2], [2], [1], [1], [0, 0, 0, 1, 1, 1], [0], [0]>} : vector<1x8x32xbf16>, vector<1x8x32xbf16>, vector<1x8x8xf32> -> vector<1x8x8xf32>
    %cst_12 = arith.constant -1.000000e+30 : f32
    %45 = vector.broadcast %cst_12 : f32 to vector<1x8x8xf32>
    %46 = arith.select %10, %44, %45 : vector<1x8x8xi1>, vector<1x8x8xf32>
    %cst_13 = arith.constant dense<0xFF800000> : vector<1x8xf32>
    %47 = vector.multi_reduction <maximumf>, %46, %cst_13 [2] : vector<1x8x8xf32> to vector<1x8xf32>
    %48 = vector.shape_cast %47 : vector<1x8xf32> to vector<1x8x1xf32>
    %49 = vector.broadcast %48 : vector<1x8x1xf32> to vector<1x8x8xf32>
    %50 = arith.subf %46, %49 : vector<1x8x8xf32>
    %51 = math.exp %50 : vector<1x8x8xf32>
    %cst_14 = arith.constant dense<0.000000e+00> : vector<1x8xf32>
    %52 = vector.multi_reduction <add>, %51, %cst_14 [2] : vector<1x8x8xf32> to vector<1x8xf32>
    %53 = vector.shape_cast %52 : vector<1x8xf32> to vector<1x8x1xf32>
    %54 = tpu.reciprocal %53 {approx = true} : vector<1x8x1xf32> -> vector<1x8x1xf32>
    %55 = vector.broadcast %54 : vector<1x8x1xf32> to vector<1x8x8xf32>
    %56 = arith.mulf %51, %55 : vector<1x8x8xf32>
    %57 = arith.truncf %56 : vector<1x8x8xf32> to vector<1x8x8xbf16>
    %cst_15 = arith.constant dense<0.000000e+00> : vector<1x8x32xf32>
    %58 = tpu.matmul %57, %43, %cst_15 {dimension_numbers = #tpu.dot_dimension_numbers<[2], [1], [1], [2], [0, 0, 0, 1, 1, 2], [0], [0]>} : vector<1x8x8xbf16>, vector<1x8x32xbf16>, vector<1x8x32xf32> -> vector<1x8x32xf32>
    %59 = vector.extract_strided_slice %6 {offsets = [0, 64], sizes = [8, 32], strides = [1, 1]} : vector<8x384xf32> to vector<8x32xf32>
    %60 = vector.shape_cast %59 : vector<8x32xf32> to vector<1x8x32xf32>
    %61 = arith.truncf %60 : vector<1x8x32xf32> to vector<1x8x32xbf16>
    %62 = vector.extract_strided_slice %6 {offsets = [0, 192], sizes = [8, 32], strides = [1, 1]} : vector<8x384xf32> to vector<8x32xf32>
    %63 = vector.shape_cast %62 : vector<8x32xf32> to vector<1x8x32xf32>
    %64 = arith.truncf %63 : vector<1x8x32xf32> to vector<1x8x32xbf16>
    %65 = vector.extract_strided_slice %6 {offsets = [0, 320], sizes = [8, 32], strides = [1, 1]} : vector<8x384xf32> to vector<8x32xf32>
    %66 = vector.shape_cast %65 : vector<8x32xf32> to vector<1x8x32xf32>
    %67 = arith.truncf %66 : vector<1x8x32xf32> to vector<1x8x32xbf16>
    %cst_16 = arith.constant dense<0.000000e+00> : vector<1x8x8xf32>
    %68 = tpu.matmul %61, %64, %cst_16 {dimension_numbers = #tpu.dot_dimension_numbers<[2], [2], [1], [1], [0, 0, 0, 1, 1, 1], [0], [0]>} : vector<1x8x32xbf16>, vector<1x8x32xbf16>, vector<1x8x8xf32> -> vector<1x8x8xf32>
    %cst_17 = arith.constant -1.000000e+30 : f32
    %69 = vector.broadcast %cst_17 : f32 to vector<1x8x8xf32>
    %70 = arith.select %10, %68, %69 : vector<1x8x8xi1>, vector<1x8x8xf32>
    %cst_18 = arith.constant dense<0xFF800000> : vector<1x8xf32>
    %71 = vector.multi_reduction <maximumf>, %70, %cst_18 [2] : vector<1x8x8xf32> to vector<1x8xf32>
    %72 = vector.shape_cast %71 : vector<1x8xf32> to vector<1x8x1xf32>
    %73 = vector.broadcast %72 : vector<1x8x1xf32> to vector<1x8x8xf32>
    %74 = arith.subf %70, %73 : vector<1x8x8xf32>
    %75 = math.exp %74 : vector<1x8x8xf32>
    %cst_19 = arith.constant dense<0.000000e+00> : vector<1x8xf32>
    %76 = vector.multi_reduction <add>, %75, %cst_19 [2] : vector<1x8x8xf32> to vector<1x8xf32>
    %77 = vector.shape_cast %76 : vector<1x8xf32> to vector<1x8x1xf32>
    %78 = tpu.reciprocal %77 {approx = true} : vector<1x8x1xf32> -> vector<1x8x1xf32>
    %79 = vector.broadcast %78 : vector<1x8x1xf32> to vector<1x8x8xf32>
    %80 = arith.mulf %75, %79 : vector<1x8x8xf32>
    %81 = arith.truncf %80 : vector<1x8x8xf32> to vector<1x8x8xbf16>
    %cst_20 = arith.constant dense<0.000000e+00> : vector<1x8x32xf32>
    %82 = tpu.matmul %81, %67, %cst_20 {dimension_numbers = #tpu.dot_dimension_numbers<[2], [1], [1], [2], [0, 0, 0, 1, 1, 2], [0], [0]>} : vector<1x8x8xbf16>, vector<1x8x32xbf16>, vector<1x8x32xf32> -> vector<1x8x32xf32>
    %83 = vector.extract_strided_slice %6 {offsets = [0, 96], sizes = [8, 32], strides = [1, 1]} : vector<8x384xf32> to vector<8x32xf32>
    %84 = vector.shape_cast %83 : vector<8x32xf32> to vector<1x8x32xf32>
    %85 = arith.truncf %84 : vector<1x8x32xf32> to vector<1x8x32xbf16>
    %86 = vector.extract_strided_slice %6 {offsets = [0, 224], sizes = [8, 32], strides = [1, 1]} : vector<8x384xf32> to vector<8x32xf32>
    %87 = vector.shape_cast %86 : vector<8x32xf32> to vector<1x8x32xf32>
    %88 = arith.truncf %87 : vector<1x8x32xf32> to vector<1x8x32xbf16>
    %89 = vector.extract_strided_slice %6 {offsets = [0, 352], sizes = [8, 32], strides = [1, 1]} : vector<8x384xf32> to vector<8x32xf32>
    %90 = vector.shape_cast %89 : vector<8x32xf32> to vector<1x8x32xf32>
    %91 = arith.truncf %90 : vector<1x8x32xf32> to vector<1x8x32xbf16>
    %cst_21 = arith.constant dense<0.000000e+00> : vector<1x8x8xf32>
    %92 = tpu.matmul %85, %88, %cst_21 {dimension_numbers = #tpu.dot_dimension_numbers<[2], [2], [1], [1], [0, 0, 0, 1, 1, 1], [0], [0]>} : vector<1x8x32xbf16>, vector<1x8x32xbf16>, vector<1x8x8xf32> -> vector<1x8x8xf32>
    %cst_22 = arith.constant -1.000000e+30 : f32
    %93 = vector.broadcast %cst_22 : f32 to vector<1x8x8xf32>
    %94 = arith.select %10, %92, %93 : vector<1x8x8xi1>, vector<1x8x8xf32>
    %cst_23 = arith.constant dense<0xFF800000> : vector<1x8xf32>
    %95 = vector.multi_reduction <maximumf>, %94, %cst_23 [2] : vector<1x8x8xf32> to vector<1x8xf32>
    %96 = vector.shape_cast %95 : vector<1x8xf32> to vector<1x8x1xf32>
    %97 = vector.broadcast %96 : vector<1x8x1xf32> to vector<1x8x8xf32>
    %98 = arith.subf %94, %97 : vector<1x8x8xf32>
    %99 = math.exp %98 : vector<1x8x8xf32>
    %cst_24 = arith.constant dense<0.000000e+00> : vector<1x8xf32>
    %100 = vector.multi_reduction <add>, %99, %cst_24 [2] : vector<1x8x8xf32> to vector<1x8xf32>
    %101 = vector.shape_cast %100 : vector<1x8xf32> to vector<1x8x1xf32>
    %102 = tpu.reciprocal %101 {approx = true} : vector<1x8x1xf32> -> vector<1x8x1xf32>
    %103 = vector.broadcast %102 : vector<1x8x1xf32> to vector<1x8x8xf32>
    %104 = arith.mulf %99, %103 : vector<1x8x8xf32>
    %105 = arith.truncf %104 : vector<1x8x8xf32> to vector<1x8x8xbf16>
    %cst_25 = arith.constant dense<0.000000e+00> : vector<1x8x32xf32>
    %106 = tpu.matmul %105, %91, %cst_25 {dimension_numbers = #tpu.dot_dimension_numbers<[2], [1], [1], [2], [0, 0, 0, 1, 1, 2], [0], [0]>} : vector<1x8x8xbf16>, vector<1x8x32xbf16>, vector<1x8x32xf32> -> vector<1x8x32xf32>
    %107 = tpu.concatenate %34, %58, %82, %106 in 2 : vector<1x8x32xf32>, vector<1x8x32xf32>, vector<1x8x32xf32>, vector<1x8x32xf32> -> vector<1x8x128xf32>
    %108 = vector.shape_cast %107 : vector<1x8x128xf32> to vector<8x128xf32>
    %109 = arith.truncf %108 : vector<8x128xf32> to vector<8x128xbf16>
    %c0_26 = arith.constant 0 : index
    %c0_27 = arith.constant 0 : index
    %110 = vector.load %arg4[%c0_26, %c0_27] : memref<128x128xbf16, #tpu.memory_space<vmem>>, vector<128x128xbf16>
    %cst_28 = arith.constant dense<0.000000e+00> : vector<8x128xf32>
    %111 = tpu.matmul %109, %110, %cst_28 {dimension_numbers = #tpu.dot_dimension_numbers<[1], [0], [0], [1], [0, 0, 1, 1], [], []>} : vector<8x128xbf16>, vector<128x128xbf16>, vector<8x128xf32> -> vector<8x128xf32>
    %c0_29 = arith.constant 0 : index
    %c0_30 = arith.constant 0 : index
    %112 = vector.load %arg5[%c0_29, %c0_30] : memref<1x128xf32, #tpu.memory_space<vmem>>, vector<1x128xf32>
    %113 = vector.broadcast %112 : vector<1x128xf32> to vector<8x128xf32>
    %114 = arith.addf %111, %113 : vector<8x128xf32>
    %115 = vector.shape_cast %114 : vector<8x128xf32> to vector<1x8x128xf32>
    %116 = arith.truncf %115 : vector<1x8x128xf32> to vector<1x8x128xbf16>
    %c0_31 = arith.constant 0 : index
    %c0_32 = arith.constant 0 : index
    %c0_33 = arith.constant 0 : index
    %117 = vector.load %arg6[%c0_31, %c0_32, %c0_33] : memref<1x8x128xbf16, #tpu.memory_space<vmem>>, vector<1x8x128xbf16>
    tpu.vector_store %arg6[%c0_31, %c0_32, %c0_33], %116 {strides = array<i32>} : memref<1x8x128xbf16, #tpu.memory_space<vmem>>, vector<1x8x128xbf16>,
    return
  }
  func.func @transform_0(%arg0: i32) -> (i32, i32, i32) {
    %c0_i32 = arith.constant 0 : i32
    %c0_i32_0 = arith.constant 0 : i32
    %c0_i32_1 = arith.constant 0 : i32
    return %arg0, %c0_i32, %c0_i32_0 : i32, i32, i32
  }
  func.func @transform_1(%arg0: i32) -> (i32, i32) {
    %c0_i32 = arith.constant 0 : i32
    %c0_i32_0 = arith.constant 0 : i32
    %c0_i32_1 = arith.constant 0 : i32
    return %c0_i32, %c0_i32_0 : i32, i32
  }
  func.func @transform_2(%arg0: i32) -> (i32, i32) {
    %c0_i32 = arith.constant 0 : i32
    %c0_i32_0 = arith.constant 0 : i32
    %c0_i32_1 = arith.constant 0 : i32
    return %c0_i32, %c0_i32_0 : i32, i32
  }
  func.func @transform_3(%arg0: i32) -> (i32, i32) {
    %c0_i32 = arith.constant 0 : i32
    %c0_i32_0 = arith.constant 0 : i32
    %c0_i32_1 = arith.constant 0 : i32
    return %c0_i32, %c0_i32_0 : i32, i32
  }
  func.func @transform_4(%arg0: i32) -> (i32, i32) {
    %c0_i32 = arith.constant 0 : i32
    %c0_i32_0 = arith.constant 0 : i32
    %c0_i32_1 = arith.constant 0 : i32
    return %c0_i32, %c0_i32_0 : i32, i32
  }
  func.func @transform_5(%arg0: i32) -> (i32, i32, i32) {
    %c0_i32 = arith.constant 0 : i32
    %c0_i32_0 = arith.constant 0 : i32
    %c0_i32_1 = arith.constant 0 : i32
    return %arg0, %c0_i32, %c0_i32_0 : i32, i32, i32
  }
}

</mosaic_0001>

<llo_original>
// kernel: tpu_custom_call.1
$region0: #{tpu_custom_call.1}
  #allocation0 [shape = 'u32[]', space=smem, size = 0x4, offset = 0x4, fixed_abs, tag = 'smem constant byte address 0x4 - core index']
  #allocation1 [shape = 'u32[144,128]{1,0:T(1,128)}', space=vmem, size = 0x12000, scoped, tag = 'internal scratch']
  %s0 = inlined_call_operand.hbm [shape: bf16[2,8,128], index: 0, kind: input, shape index: {}]
  %s1 = inlined_call_operand.hbm [shape: bf16[128,384], index: 1, kind: input, shape index: {}]
  %s2 = inlined_call_operand.hbm [shape: f32[1,384], index: 2, kind: input, shape index: {}]
  %s3 = inlined_call_operand.hbm [shape: bf16[128,128], index: 3, kind: input, shape index: {}]
  %s4 = inlined_call_operand.hbm [shape: f32[1,128], index: 4, kind: input, shape index: {}]
  %s5 = inlined_call_operand.hbm [shape: bf16[2,8,128], index: 5, kind: output, shape index: {}]
  %s6 = sld [smem:[#allocation0]]
  $region73: #{tpu_custom_call.1} parent=0
    _
  %s8 = ssub.s32 1, %s6
  %s9 = scalar_select 0, %s8, %s6
  $region1: #{tpu_custom_call.1} parent=0
    #allocation2 [shape = 'u8[4096]{0}', space=vmem, size = 0x1000, scoped, tag = 'input window, operand 0']
    #allocation3 [shape = 's32[2]{0}', space=sflag, size = 0x8, scoped, tag = 'scoped memory for tpu_custom_call.1']
    #allocation4 [shape = 's32[2]{0}', space=sflag, size = 0x8, scoped, tag = 'scoped memory for tpu_custom_call.1']
    #allocation5 [shape = 'u8[98304]{0}', space=vmem, size = 0x18000, scoped, tag = 'input window, operand 1, single buffered']
    #allocation6 [shape = 's32[1]{0}', space=sflag, size = 0x4, scoped, tag = 'scoped memory for tpu_custom_call.1']
    #allocation7 [shape = 'u8[1536]{0}', space=vmem, size = 0x800, scoped, tag = 'input window, operand 2, single buffered']
    #allocation8 [shape = 'u8[32768]{0}', space=vmem, size = 0x8000, scoped, tag = 'input window, operand 3, single buffered']
    #allocation9 [shape = 's32[1]{0}', space=sflag, size = 0x4, scoped, tag = 'scoped memory for tpu_custom_call.1']
    #allocation10 [shape = 'u8[512]{0}', space=vmem, size = 0x400, scoped, tag = 'input window, operand 4, single buffered']
    #allocation11 [shape = 'u8[4096]{0}', space=vmem, size = 0x1000, scoped, tag = 'output window, operand 0']
    %10 = vsyncpa [#allocation3], 0
    %s11 = scalar_lea.sflag [#allocation3], 1
    %12 = vsyncpa %s11, 0
    %13 = vsyncpa [#allocation6], 0
    %14 = vsyncpa [#allocation9], 0
    %15 = vsyncpa [#allocation4], 0
    %s16 = scalar_lea.sflag [#allocation4], 1
    %17 = vsyncpa %s16, 0
    loop: start=0, step=1, limit=4
    $region2: #{tpu_custom_call.1} parent=1 // loop_pre_header
      _
    $region3: #{tpu_custom_call.1} parent=1 // loop_header
      %s19 = sphi 0, %s23
      %p20 = scmp.ge.s32.totalorder %s19, 4
      %s29 = sphi 0, %s31
      %s32 = sphi 0, %s29
      %s33 = sphi 0, %s32
      %s49 = sphi 0, %s33
      %s53 = sphi 0, %s53
      %s55 = sphi 0, %s53
      %s56 = sphi 0, %s55
      %s70 = sphi 0, %s56
      %s74 = sphi 0, %s74
      %s76 = sphi 0, %s74
      %s77 = sphi 0, %s76
      %s91 = sphi 0, %s77
      %s95 = sphi 0, %s95
      %s97 = sphi 0, %s95
      %s98 = sphi 0, %s97
      %s112 = sphi 0, %s98
      %s116 = sphi 0, %s116
      %s118 = sphi 0, %s116
      %s119 = sphi 0, %s118
      %s133 = sphi 0, %s119
      %s139 = sphi 0, %s141
      %s142 = sphi 0, %s139
      %s143 = sphi 0, %s142
      %s159 = sphi 0, %s143
    $region4: #{tpu_custom_call.1} parent=1 // loop_header_branch
      %22 = sbr.rel (%p20) target = $region8
    $region5: #{tpu_custom_call.1} parent=1 // loop_body
      %s24 = ssub.s32 %s19, 1
      %s25 = ssub.s32 %s19, 2
      %s26 = sadd.s32 %s19, 1
      %s27 = ssub.s32 %s19, %s26
      %p28 = scmp.eq.s32.totalorder %s27, 0
      %s30 = sadd.s32 %s29, 1
      %s31 = scalar_select %p28, %s29, %s30
      %p34 = pneg %p28
      %p35 = scmp.eq.s32.totalorder %s19, 1
      %p36 = por %p34, %p35
      %p37 = scmp.ne.s32.totalorder %s29, %s32
      %p38 = scmp.eq.s32.totalorder %s19, 0
      %p39 = por %p37, %p38
      %p40 = scmp.ne.s32.totalorder %s29, %s32
      %p41 = scmp.eq.s32.totalorder %s24, 1
      %p42 = por %p40, %p41
      %p43 = scmp.ne.s32.totalorder %s32, %s33
      %p44 = scmp.eq.s32.totalorder %s24, 0
      %p45 = por %p43, %p44
      %p46 = scmp.ne.s32.totalorder %s32, %s33
      %p47 = scmp.eq.s32.totalorder %s25, 1
      %p48 = por %p46, %p47
      %p50 = scmp.ne.s32.totalorder %s33, %s49
      %p51 = scmp.eq.s32.totalorder %s25, 0
      %p52 = por %p50, %p51
      %s54 = sadd.s32 %s53, 1
      %p57 = scmp.eq.s32.totalorder %s19, 1
      %p58 = scmp.ne.s32.totalorder %s53, %s55
      %p59 = scmp.eq.s32.totalorder %s19, 0
      %p60 = por %p58, %p59
      %p61 = scmp.ne.s32.totalorder %s53, %s55
      %p62 = scmp.eq.s32.totalorder %s24, 1
      %p63 = por %p61, %p62
      %p64 = scmp.ne.s32.totalorder %s55, %s56
      %p65 = scmp.eq.s32.totalorder %s24, 0
      %p66 = por %p64, %p65
      %p67 = scmp.ne.s32.totalorder %s55, %s56
      %p68 = scmp.eq.s32.totalorder %s25, 1
      %p69 = por %p67, %p68
      %p71 = scmp.ne.s32.totalorder %s56, %s70
      %p72 = scmp.eq.s32.totalorder %s25, 0
      %p73 = por %p71, %p72
      %s75 = sadd.s32 %s74, 1
      %p78 = scmp.eq.s32.totalorder %s19, 1
      %p79 = scmp.ne.s32.totalorder %s74, %s76
      %p80 = scmp.eq.s32.totalorder %s19, 0
      %p81 = por %p79, %p80
      %p82 = scmp.ne.s32.totalorder %s74, %s76
      %p83 = scmp.eq.s32.totalorder %s24, 1
      %p84 = por %p82, %p83
      %p85 = scmp.ne.s32.totalorder %s76, %s77
      %p86 = scmp.eq.s32.totalorder %s24, 0
      %p87 = por %p85, %p86
      %p88 = scmp.ne.s32.totalorder %s76, %s77
      %p89 = scmp.eq.s32.totalorder %s25, 1
      %p90 = por %p88, %p89
      %p92 = scmp.ne.s32.totalorder %s77, %s91
      %p93 = scmp.eq.s32.totalorder %s25, 0
      %p94 = por %p92, %p93
      %s96 = sadd.s32 %s95, 1
      %p99 = scmp.eq.s32.totalorder %s19, 1
      %p100 = scmp.ne.s32.totalorder %s95, %s97
      %p101 = scmp.eq.s32.totalorder %s19, 0
      %p102 = por %p100, %p101
      %p103 = scmp.ne.s32.totalorder %s95, %s97
      %p104 = scmp.eq.s32.totalorder %s24, 1
      %p105 = por %p103, %p104
      %p106 = scmp.ne.s32.totalorder %s97, %s98
      %p107 = scmp.eq.s32.totalorder %s24, 0
      %p108 = por %p106, %p107
      %p109 = scmp.ne.s32.totalorder %s97, %s98
      %p110 = scmp.eq.s32.totalorder %s25, 1
      %p111 = por %p109, %p110
      %p113 = scmp.ne.s32.totalorder %s98, %s112
      %p114 = scmp.eq.s32.totalorder %s25, 0
      %p115 = por %p113, %p114
      %s117 = sadd.s32 %s116, 1
      %p120 = scmp.eq.s32.totalorder %s19, 1
      %p121 = scmp.ne.s32.totalorder %s116, %s118
      %p122 = scmp.eq.s32.totalorder %s19, 0
      %p123 = por %p121, %p122
      %p124 = scmp.ne.s32.totalorder %s116, %s118
      %p125 = scmp.eq.s32.totalorder %s24, 1
      %p126 = por %p124, %p125
      %p127 = scmp.ne.s32.totalorder %s118, %s119
      %p128 = scmp.eq.s32.totalorder %s24, 0
      %p129 = por %p127, %p128
      %p130 = scmp.ne.s32.totalorder %s118, %s119
      %p131 = scmp.eq.s32.totalorder %s25, 1
      %p132 = por %p130, %p131
      %p134 = scmp.ne.s32.totalorder %s119, %s133
      %p135 = scmp.eq.s32.totalorder %s25, 0
      %p136 = por %p134, %p135
      %s137 = ssub.s32 %s19, %s26
      %p138 = scmp.eq.s32.totalorder %s137, 0
      %s140 = sadd.s32 %s139, 1
      %s141 = scalar_select %p138, %s139, %s140
      %p144 = pneg %p138
      %p145 = scmp.eq.s32.totalorder %s19, 1
      %p146 = por %p144, %p145
      %p147 = scmp.ne.s32.totalorder %s139, %s142
      %p148 = scmp.eq.s32.totalorder %s19, 0
      %p149 = por %p147, %p148
      %p150 = scmp.ne.s32.totalorder %s139, %s142
      %p151 = scmp.eq.s32.totalorder %s24, 1
      %p152 = por %p150, %p151
      %p153 = scmp.ne.s32.totalorder %s142, %s143
      %p154 = scmp.eq.s32.totalorder %s24, 0
      %p155 = por %p153, %p154
      %p156 = scmp.ne.s32.totalorder %s142, %s143
      %p157 = scmp.eq.s32.totalorder %s25, 1
      %p158 = por %p156, %p157
      %p160 = scmp.ne.s32.totalorder %s143, %s159
      %p161 = scmp.eq.s32.totalorder %s25, 0
      %p162 = por %p160, %p161
      %p163 = scmp.le.s32.totalorder 1, %s19
      %p164 = scmp.lt.s32.totalorder %s19, 3
      %p165 = pnand %p163, %p164
      %p166 = pneg %p165
      // Predicated region
      $region9: #{tpu_custom_call.1} parent=5 // pred_check
        _
      $region10: #{tpu_custom_call.1} parent=5 // pred_check_branch
        %168 = sbr.rel (%p165) target = $region12
      $region11: #{tpu_custom_call.1} parent=5 // pred_region
        %s169 = ssub.s32 %s19, 1
        // Predicated region
        $region13: #{tpu_custom_call.1} parent=11 // pred_check
          %p170 = pneg %p66
        $region14: #{tpu_custom_call.1} parent=11 // pred_check_branch
          %172 = sbr.rel (%p170) target = $region16
        $region15: #{tpu_custom_call.1} parent=11 // pred_region
          %s174 = ssub.s32 3072, 3072
          %175 = vsyncadd [#allocation6], %s174
          %s176 = sshll.u32 [#allocation5], 4
          %s177 = int_to_ptr.vmem [resolvable:$true] %s176
          %182 = dma.hbm_to_vmem [thread:$0]  %s1, 3072, %s177, [#allocation6], 192, 192, 12
        $region16: #{tpu_custom_call.1} parent=11 // pred_fallthru
          _
        // Predicated region
        $region17: #{tpu_custom_call.1} parent=11 // pred_check
          %p183 = pneg %p87
        $region18: #{tpu_custom_call.1} parent=11 // pred_check_branch
          %185 = sbr.rel (%p183) target = $region20
        $region19: #{tpu_custom_call.1} parent=11 // pred_region
          %s187 = ssub.s32 48, 48
          %188 = vsyncadd [#allocation6], %s187
          %s190 = sshll.u32 [#allocation7], 4
          %s191 = int_to_ptr.vmem [resolvable:$true] %s190
          %193 = dma.hbm_to_vmem [thread:$0]  %s2, 48, %s191, [#allocation6]
        $region20: #{tpu_custom_call.1} parent=11 // pred_fallthru
          _
        // Predicated region
        $region21: #{tpu_custom_call.1} parent=11 // pred_check
          %p194 = pneg %p108
        $region22: #{tpu_custom_call.1} parent=11 // pred_check_branch
          %196 = sbr.rel (%p194) target = $region24
        $region23: #{tpu_custom_call.1} parent=11 // pred_region
          %s198 = ssub.s32 1024, 1024
          %199 = vsyncadd [#allocation9], %s198
          %s200 = sshll.u32 [#allocation8], 4
          %s201 = int_to_ptr.vmem [resolvable:$true] %s200
          %206 = dma.hbm_to_vmem [thread:$0]  %s3, 1024, %s201, [#allocation9], 64, 64, 4
        $region24: #{tpu_custom_call.1} parent=11 // pred_fallthru
          _
        // Predicated region
        $region25: #{tpu_custom_call.1} parent=11 // pred_check
          %p207 = pneg %p129
        $region26: #{tpu_custom_call.1} parent=11 // pred_check_branch
          %209 = sbr.rel (%p207) target = $region28
        $region27: #{tpu_custom_call.1} parent=11 // pred_region
          %s211 = ssub.s32 16, 16
          %212 = vsyncadd [#allocation9], %s211
          %s214 = sshll.u32 [#allocation10], 4
          %s215 = int_to_ptr.vmem [resolvable:$true] %s214
          %217 = dma.hbm_to_vmem [thread:$0]  %s4, 16, %s215, [#allocation9]
        $region28: #{tpu_custom_call.1} parent=11 // pred_fallthru
          _
      $region12: #{tpu_custom_call.1} parent=5 // pred_fallthru
        _
      %p218 = scmp.lt.s32.totalorder %s19, 2
      // Predicated region
      $region29: #{tpu_custom_call.1} parent=5 // pred_check
        %p219 = pneg %p218
      $region30: #{tpu_custom_call.1} parent=5 // pred_check_branch
        %221 = sbr.rel (%p219) target = $region32
      $region31: #{tpu_custom_call.1} parent=5 // pred_region
        // Predicated region
        $region33: #{tpu_custom_call.1} parent=31 // pred_check
          %p222 = pneg %p39
        $region34: #{tpu_custom_call.1} parent=31 // pred_check_branch
          %224 = sbr.rel (%p222) target = $region36
        $region35: #{tpu_custom_call.1} parent=31 // pred_region
          %s225 = sand.u32 %s29, 1
          %s226 = scalar_lea.sflag [#allocation3], %s225
          %s227 = sand.u32 %s29, 1
          %s228 = smul.addr %s227, 4
          %s229 = scalar_lea.vmem [#allocation2], %s228
          %s231 = ssub.s32 64, 64
          %232 = vsyncadd %s226, %s231
          %s233 = smul.addr %s19, 64
          %s234 = scalar_lea.hbm %s0, %s233
          %s236 = sshll.u32 %s229, 4
          %s237 = int_to_ptr.vmem [resolvable:$true] %s236
          %239 = dma.hbm_to_vmem [thread:$0]  %s234, 64, %s237, %s226
        $region36: #{tpu_custom_call.1} parent=31 // pred_fallthru
          _
      $region32: #{tpu_custom_call.1} parent=5 // pred_fallthru
        _
      %p240 = scmp.le.s32.totalorder 1, %s19
      %p241 = scmp.lt.s32.totalorder %s19, 3
      %p242 = pnand %p240, %p241
      %p243 = pneg %p242
      // Predicated region
      $region37: #{tpu_custom_call.1} parent=5 // pred_check
        _
      $region38: #{tpu_custom_call.1} parent=5 // pred_check_branch
        %245 = sbr.rel (%p242) target = $region40
      $region39: #{tpu_custom_call.1} parent=5 // pred_region
        %s246 = ssub.s32 %s19, 1
        %s247 = sand.u32 %s32, 1
        %s248 = scalar_lea.sflag [#allocation3], %s247
        %s249 = sand.u32 %s32, 1
        %s250 = smul.addr %s249, 4
        %s251 = scalar_lea.vmem [#allocation2], %s250
        // Predicated region
        $region41: #{tpu_custom_call.1} parent=39 // pred_check
          %p252 = pneg %p45
        $region42: #{tpu_custom_call.1} parent=39 // pred_check_branch
          %254 = sbr.rel (%p252) target = $region44
        $region43: #{tpu_custom_call.1} parent=39 // pred_region
          %255 = dma.done %s248, 64
        $region44: #{tpu_custom_call.1} parent=39 // pred_fallthru
          _
        // Predicated region
        $region45: #{tpu_custom_call.1} parent=39 // pred_check
          %p256 = pneg %p66
        $region46: #{tpu_custom_call.1} parent=39 // pred_check_branch
          %258 = sbr.rel (%p256) target = $region48
        $region47: #{tpu_custom_call.1} parent=39 // pred_region
          %259 = dma.done [#allocation6], 3072
        $region48: #{tpu_custom_call.1} parent=39 // pred_fallthru
          _
        // Predicated region
        $region49: #{tpu_custom_call.1} parent=39 // pred_check
          %p260 = pneg %p87
        $region50: #{tpu_custom_call.1} parent=39 // pred_check_branch
          %262 = sbr.rel (%p260) target = $region52
        $region51: #{tpu_custom_call.1} parent=39 // pred_region
          %263 = dma.done [#allocation6], 48
        $region52: #{tpu_custom_call.1} parent=39 // pred_fallthru
          _
        // Predicated region
        $region53: #{tpu_custom_call.1} parent=39 // pred_check
          %p264 = pneg %p108
        $region54: #{tpu_custom_call.1} parent=39 // pred_check_branch
          %266 = sbr.rel (%p264) target = $region56
        $region55: #{tpu_custom_call.1} parent=39 // pred_region
          %267 = dma.done [#allocation9], 1024
        $region56: #{tpu_custom_call.1} parent=39 // pred_fallthru
          _
        // Predicated region
        $region57: #{tpu_custom_call.1} parent=39 // pred_check
          %p268 = pneg %p129
        $region58: #{tpu_custom_call.1} parent=39 // pred_check_branch
          %270 = sbr.rel (%p268) target = $region60
        $region59: #{tpu_custom_call.1} parent=39 // pred_region
          %271 = dma.done [#allocation9], 16
        $region60: #{tpu_custom_call.1} parent=39 // pred_fallthru
          _
        %s272 = sand.u32 %s32, 1
        %s273 = scalar_lea.sflag [#allocation3], %s272
        %s274 = sand.u32 %s32, 1
        %s275 = smul.addr %s274, 4
        %s276 = scalar_lea.vmem [#allocation2], %s275
        %p277 = pneg %p45
        %p278 = pneg %p42
        %p279 = pneg %p66
        %p280 = pneg %p63
        %p281 = pneg %p87
        %p282 = pneg %p84
        %p283 = pneg %p108
        %p284 = pneg %p105
        %p285 = pneg %p129
        %p286 = pneg %p126
        %p287 = pneg %p155
        %p288 = pneg %p152
        %s289 = sand.u32 %s142, 1
        %s290 = scalar_lea.sflag [#allocation4], %s289
        %s291 = sand.u32 %s142, 1
        %s292 = smul.addr %s291, 4
        %s293 = scalar_lea.vmem [#allocation11], %s292
        %v295 = vld [vmem:[%s251] sm:$0xf]
        %v296 = vld [vmem:[#allocation5] sm:$0xff]
        %v297 = vld [vmem:[#allocation5 + $0x8] sm:$0xf]
        %v298 = vld [vmem:[#allocation5 + $0xc] sm:$0xff]
        %v299 = vld [vmem:[#allocation5 + $0x14] sm:$0xf]
        %v300 = vld [vmem:[#allocation5 + $0x18] sm:$0xff]
        %v301 = vld [vmem:[#allocation5 + $0x20] sm:$0xf]
        %v302 = vld [vmem:[#allocation5 + $0x24] sm:$0xff]
        %v303 = vld [vmem:[#allocation5 + $0x2c] sm:$0xf]
        %v304 = vld [vmem:[#allocation5 + $0x30] sm:$0xff]
        %v305 = vld [vmem:[#allocation5 + $0x38] sm:$0xf]
        %v306 = vld [vmem:[#allocation5 + $0x3c] sm:$0xff]
        %v307 = vld [vmem:[#allocation5 + $0x44] sm:$0xf]
        %v308 = vld [vmem:[#allocation5 + $0x48] sm:$0xff]
        %v309 = vld [vmem:[#allocation5 + $0x50] sm:$0xf]
        %v310 = vld [vmem:[#allocation5 + $0x54] sm:$0xff]
        %v311 = vld [vmem:[#allocation5 + $0x5c] sm:$0xf]
        %v312 = vld [vmem:[#allocation5 + $0x60] sm:$0xff]
        %v313 = vld [vmem:[#allocation5 + $0x68] sm:$0xf]
        %v314 = vld [vmem:[#allocation5 + $0x6c] sm:$0xff]
        %v315 = vld [vmem:[#allocation5 + $0x74] sm:$0xf]
        %v316 = vld [vmem:[#allocation5 + $0x78] sm:$0xff]
        %v317 = vld [vmem:[#allocation5 + $0x80] sm:$0xf]
        %v318 = vld [vmem:[#allocation5 + $0x84] sm:$0xff]
        %v319 = vld [vmem:[#allocation5 + $0x8c] sm:$0xf]
        %v320 = vld [vmem:[#allocation5 + $0x90] sm:$0xff]
        %v321 = vld [vmem:[#allocation5 + $0x98] sm:$0xf]
        %v322 = vld [vmem:[#allocation5 + $0x9c] sm:$0xff]
        %v323 = vld [vmem:[#allocation5 + $0xa4] sm:$0xf]
        %v324 = vld [vmem:[#allocation5 + $0xa8] sm:$0xff]
        %v325 = vld [vmem:[#allocation5 + $0xb0] sm:$0xf]
        %v326 = vld [vmem:[#allocation5 + $0xb4] sm:$0xff]
        %v327 = vld [vmem:[#allocation5 + $0xbc] sm:$0xf]
        %v328 = vld [vmem:[#allocation7] sm:$0x7]
        %v330 = vlaneseq
        %v331 = vshrl.u32 %v330, 7
        %v332 = vsub.s32 0, %v331
        %v333 = vrot.slane %v328, %v332
        %v334 = vlaneseq
        %v335 = vshrl.u32 %v334, 7
        %v336 = vsub.s32 1, %v335
        %v337 = vrot.slane %v328, %v336
        %v338 = vlaneseq
        %v339 = vshrl.u32 %v338, 7
        %v340 = vsub.s32 2, %v339
        %v341 = vrot.slane %v328, %v340
        %v377 = vunpack.c.l.b16 %v296
        %v378 = vunpack.c.h.b16 %v296
        %v379 = vunpack.c.l.b16 %v297
        %v380 = vunpack.c.l.b16 %v298
        %v381 = vunpack.c.h.b16 %v298
        %v382 = vunpack.c.l.b16 %v299
        %v383 = vunpack.c.l.b16 %v300
        %v384 = vunpack.c.h.b16 %v300
        %v385 = vunpack.c.l.b16 %v301
        %v386 = vunpack.c.l.b16 %v302
        %v387 = vunpack.c.h.b16 %v302
        %v388 = vunpack.c.l.b16 %v303
        %v389 = vunpack.c.l.b16 %v304
        %v390 = vunpack.c.h.b16 %v304
        %v391 = vunpack.c.l.b16 %v305
        %v392 = vunpack.c.l.b16 %v306
        %v393 = vunpack.c.h.b16 %v306
        %v394 = vunpack.c.l.b16 %v307
        %v395 = vunpack.c.l.b16 %v308
        %v396 = vunpack.c.h.b16 %v308
        %v397 = vunpack.c.l.b16 %v309
        %v398 = vunpack.c.l.b16 %v310
        %v399 = vunpack.c.h.b16 %v310
        %v400 = vunpack.c.l.b16 %v311
        %v401 = vunpack.c.l.b16 %v312
        %v402 = vunpack.c.h.b16 %v312
        %v403 = vunpack.c.l.b16 %v313
        %v404 = vunpack.c.l.b16 %v314
        %v405 = vunpack.c.h.b16 %v314
        %v406 = vunpack.c.l.b16 %v315
        %v407 = vunpack.c.l.b16 %v316
        %v408 = vunpack.c.h.b16 %v316
        %v409 = vunpack.c.l.b16 %v317
        %v410 = vunpack.c.l.b16 %v318
        %v411 = vunpack.c.h.b16 %v318
        %v412 = vunpack.c.l.b16 %v319
        %v413 = vunpack.c.l.b16 %v320
        %v414 = vunpack.c.h.b16 %v320
        %v415 = vunpack.c.l.b16 %v321
        %v416 = vunpack.c.l.b16 %v322
        %v417 = vunpack.c.h.b16 %v322
        %v418 = vunpack.c.l.b16 %v323
        %v419 = vunpack.c.l.b16 %v324
        %v420 = vunpack.c.h.b16 %v324
        %v421 = vunpack.c.l.b16 %v325
        %v422 = vunpack.c.l.b16 %v326
        %v423 = vunpack.c.h.b16 %v326
        %v424 = vunpack.c.l.b16 %v327
        %v425 = vpack.c.b16 %v380, %v377
        %v426 = vpack.c.b16 %v381, %v378
        %v427 = vpack.c.b16 %v382, %v379
        %v428 = vpack.c.b16 %v386, %v383
        %v429 = vpack.c.b16 %v387, %v384
        %v430 = vpack.c.b16 %v388, %v385
        %v431 = vpack.c.b16 %v392, %v389
        %v432 = vpack.c.b16 %v393, %v390
        %v433 = vpack.c.b16 %v394, %v391
        %v434 = vpack.c.b16 %v398, %v395
        %v435 = vpack.c.b16 %v399, %v396
        %v436 = vpack.c.b16 %v400, %v397
        %v437 = vpack.c.b16 %v404, %v401
        %v438 = vpack.c.b16 %v405, %v402
        %v439 = vpack.c.b16 %v406, %v403
        %v440 = vpack.c.b16 %v410, %v407
        %v441 = vpack.c.b16 %v411, %v408
        %v442 = vpack.c.b16 %v412, %v409
        %v443 = vpack.c.b16 %v416, %v413
        %v444 = vpack.c.b16 %v417, %v414
        %v445 = vpack.c.b16 %v418, %v415
        %v446 = vpack.c.b16 %v422, %v419
        %v447 = vpack.c.b16 %v423, %v420
        %v448 = vpack.c.b16 %v424, %v421
        %473 = vmatprep.subr.bf16.mxu0 %v426
        %474 = vmatpush1.bf16.msra.mxu0 %v425
        %475 = vmatprep.subr.bf16.mxu0 %v429
        %476 = vmatpush1.bf16.msra.mxu0 %v428
        %477 = vmatprep.subr.bf16.mxu0 %v432
        %478 = vmatpush1.bf16.msra.mxu0 %v431
        %479 = vmatprep.subr.bf16.mxu0 %v435
        %480 = vmatpush1.bf16.msra.mxu0 %v434
        %481 = vmatprep.subr.bf16.mxu0 %v438
        %482 = vmatpush1.bf16.msra.mxu0 %v437
        %483 = vmatprep.subr.bf16.mxu0 %v441
        %484 = vmatpush1.bf16.msra.mxu0 %v440
        %485 = vmatprep.subr.bf16.mxu0 %v444
        %486 = vmatpush1.bf16.msra.mxu0 %v443
        %487 = vmatprep.subr.bf16.mxu0 %v447
        %488 = vmatpush1.bf16.msra.mxu0 %v446
        %489 = vmatprep.subr.bf16.mxu0 0
        %490 = vmatpush1.bf16.msra.mxu0 0
        %491 = vmatprep.subr.bf16.mxu0 0
        %492 = vmatpush1.bf16.msra.mxu0 0
        %493 = vmatprep.subr.bf16.mxu0 0
        %494 = vmatpush1.bf16.msra.mxu0 0
        %495 = vmatprep.subr.bf16.mxu0 0
        %496 = vmatpush1.bf16.msra.mxu0 0
        %497 = vmatprep.subr.bf16.mxu0 0
        %498 = vmatpush1.bf16.msra.mxu0 0
        %499 = vmatprep.subr.bf16.mxu0 0
        %500 = vmatpush1.bf16.msra.mxu0 0
        %501 = vmatprep.subr.bf16.mxu0 0
        %502 = vmatpush1.bf16.msra.mxu0 0
        %503 = vmatprep.subr.bf16.mxu0 0
        %504 = vmatpush1.bf16.msra.mxu0 0
        %505 = vmatprep.mubr.bf16.mxu0 0
        %506 = vmatmul.mubr.bf16.gmra.mrb[0].mxu0 %v295
        %v507 = vpop.f32.mrb[0].mxu0
        %v508 = vadd.f32 %v333, %v507
        %v509 = vpop.f32.mrb[0].mxu0
        %v510 = vadd.f32 %v337, %v509
        %v511 = vpop.f32.mrb[0].mxu0
        %v512 = vpop.f32.mrb[0].mxu0
        %513 = vdwg.mxu0
        %514 = vmatprep.subr.bf16.mxu0 0
        %515 = vmatpush1.bf16.msra.mxu0 %v427
        %516 = vmatprep.subr.bf16.mxu0 0
        %517 = vmatpush1.bf16.msra.mxu0 %v430
        %518 = vmatprep.subr.bf16.mxu0 0
        %519 = vmatpush1.bf16.msra.mxu0 %v433
        %520 = vmatprep.subr.bf16.mxu0 0
        %521 = vmatpush1.bf16.msra.mxu0 %v436
        %522 = vmatprep.subr.bf16.mxu0 0
        %523 = vmatpush1.bf16.msra.mxu0 %v439
        %524 = vmatprep.subr.bf16.mxu0 0
        %525 = vmatpush1.bf16.msra.mxu0 %v442
        %526 = vmatprep.subr.bf16.mxu0 0
        %527 = vmatpush1.bf16.msra.mxu0 %v445
        %528 = vmatprep.subr.bf16.mxu0 0
        %529 = vmatpush1.bf16.msra.mxu0 %v448
        %530 = vmatprep.subr.bf16.mxu0 0
        %531 = vmatpush1.bf16.msra.mxu0 0
        %532 = vmatprep.subr.bf16.mxu0 0
        %533 = vmatpush1.bf16.msra.mxu0 0
        %534 = vmatprep.subr.bf16.mxu0 0
        %535 = vmatpush1.bf16.msra.mxu0 0
        %536 = vmatprep.subr.bf16.mxu0 0
        %537 = vmatpush1.bf16.msra.mxu0 0
        %538 = vmatprep.subr.bf16.mxu0 0
        %539 = vmatpush1.bf16.msra.mxu0 0
        %540 = vmatprep.subr.bf16.mxu0 0
        %541 = vmatpush1.bf16.msra.mxu0 0
        %542 = vmatprep.subr.bf16.mxu0 0
        %543 = vmatpush1.bf16.msra.mxu0 0
        %544 = vmatprep.subr.bf16.mxu0 0
        %545 = vmatpush1.bf16.msra.mxu0 0
        %546 = vmatprep.mubr.bf16.mxu0 0
        %547 = vmatmul.mubr.bf16.gmra.mrb[0].mxu0 %v295
        %v548 = vpop.f32.mrb[0].mxu0
        %v549 = vadd.f32 %v341, %v548
        %v550 = vpop.f32.mrb[0].mxu0
        %v551 = vpop.f32.mrb[0].mxu0
        %v552 = vpop.f32.mrb[0].mxu0
        %553 = vdwg.mxu0
        %v554 = vlaneseq
        %v555 = vshrl.u32 %v554, 7
        %v556 = vlaneseq
        %v557 = vand.u32 %v556, 127
        %vm558 = vcmp.ge.s32.totalorder %v555, %v557
        %v559 = vpack.c.bf16 %v508, %v508
        %v560 = vpack.c.bf16 %v510, %v510
        %v561 = vpack.c.bf16 %v549, %v549
        %vm562 = vcmask 261120
        %v564 = vsel %vm562, %v559, 0
        %v567 = vsel %vm562, %v560, 0
        %569 = vmatprep.subr.bf16.mxu0 0
        %570 = vmatpush1.bf16.xpose.msra.mxu0 %v567
        %571 = vmatprep.subr.bf16.mxu0 0
        %572 = vmatpush1.bf16.xpose.msra.mxu0 0
        %573 = vmatprep.subr.bf16.mxu0 0
        %574 = vmatpush1.bf16.xpose.msra.mxu0 0
        %575 = vmatprep.subr.bf16.mxu0 0
        %576 = vmatpush1.bf16.xpose.msra.mxu0 0
        %577 = vmatprep.subr.bf16.mxu0 0
        %578 = vmatpush1.bf16.xpose.msra.mxu0 0
        %579 = vmatprep.subr.bf16.mxu0 0
        %580 = vmatpush1.bf16.xpose.msra.mxu0 0
        %581 = vmatprep.subr.bf16.mxu0 0
        %582 = vmatpush1.bf16.xpose.msra.mxu0 0
        %583 = vmatprep.subr.bf16.mxu0 0
        %584 = vmatpush1.bf16.xpose.msra.mxu0 0
        %585 = vmatprep.subr.bf16.mxu0 0
        %586 = vmatpush1.bf16.xpose.msra.mxu0 0
        %587 = vmatprep.subr.bf16.mxu0 0
        %588 = vmatpush1.bf16.xpose.msra.mxu0 0
        %589 = vmatprep.subr.bf16.mxu0 0
        %590 = vmatpush1.bf16.xpose.msra.mxu0 0
        %591 = vmatprep.subr.bf16.mxu0 0
        %592 = vmatpush1.bf16.xpose.msra.mxu0 0
        %593 = vmatprep.subr.bf16.mxu0 0
        %594 = vmatpush1.bf16.xpose.msra.mxu0 0
        %595 = vmatprep.subr.bf16.mxu0 0
        %596 = vmatpush1.bf16.xpose.msra.mxu0 0
        %597 = vmatprep.subr.bf16.mxu0 0
        %598 = vmatpush1.bf16.xpose.msra.mxu0 0
        %599 = vmatprep.subr.bf16.mxu0 0
        %600 = vmatpush1.bf16.xpose.msra.mxu0 0
        %601 = vmatprep.mubr.bf16.mxu0 0
        %602 = vmatmul.mubr.bf16.gmra.mrb[0].mxu0 %v564
        %v603 = vpop.f32.mrb[0].mxu0
        %v604 = vadd.f32 0.0, %v603
        %v605 = vpop.f32.mrb[0].mxu0
        %v606 = vpop.f32.mrb[0].mxu0
        %v607 = vpop.f32.mrb[0].mxu0
        %608 = vdwg.mxu0
        %v609 = vsel %vm558, %v604, -1e+30
        %vm610 = vcmask 64512
        %v611 = vsel %vm610, %v609, -inf
        %612 = vmax.xlane.f32.xlu0 %v611
        %v613 = vpop.xlane.xlu0 %612
        %v614 = vsub.f32 %v609, %v613
        %v615 = vmul.f32 %v614, 1.442695
        %v616 = vpow.pop %v615
        %v617 = vsel %vm610, %v616, 0.0
        %618 = vadd.xlane.f32.xlu0 %v617
        %v619 = vpop.xlane.xlu0 %618
        %v620 = vrcp.pop %v619
        %v621 = vmul.f32 %v616, %v620
        %v622 = vpack.c.bf16 %v621, %v621
        %v624 = vsel %vm610, %v622, 0
        %vm626 = vcmask 1043456
        %v628 = vsel %vm626, %v561, 0
        %630 = vmatprep.subr.bf16.mxu0 0
        %631 = vmatpush1.bf16.msra.mxu0 %v628
        %632 = vmatprep.subr.bf16.mxu0 0
        %633 = vmatpush1.bf16.msra.mxu0 0
        %634 = vmatprep.subr.bf16.mxu0 0
        %635 = vmatpush1.bf16.msra.mxu0 0
        %636 = vmatprep.subr.bf16.mxu0 0
        %637 = vmatpush1.bf16.msra.mxu0 0
        %638 = vmatprep.subr.bf16.mxu0 0
        %639 = vmatpush1.bf16.msra.mxu0 0
        %640 = vmatprep.subr.bf16.mxu0 0
        %641 = vmatpush1.bf16.msra.mxu0 0
        %642 = vmatprep.subr.bf16.mxu0 0
        %643 = vmatpush1.bf16.msra.mxu0 0
        %644 = vmatprep.subr.bf16.mxu0 0
        %645 = vmatpush1.bf16.msra.mxu0 0
        %646 = vmatprep.subr.bf16.mxu0 0
        %647 = vmatpush1.bf16.msra.mxu0 0
        %648 = vmatprep.subr.bf16.mxu0 0
        %649 = vmatpush1.bf16.msra.mxu0 0
        %650 = vmatprep.subr.bf16.mxu0 0
        %651 = vmatpush1.bf16.msra.mxu0 0
        %652 = vmatprep.subr.bf16.mxu0 0
        %653 = vmatpush1.bf16.msra.mxu0 0
        %654 = vmatprep.subr.bf16.mxu0 0
        %655 = vmatpush1.bf16.msra.mxu0 0
        %656 = vmatprep.subr.bf16.mxu0 0
        %657 = vmatpush1.bf16.msra.mxu0 0
        %658 = vmatprep.subr.bf16.mxu0 0
        %659 = vmatpush1.bf16.msra.mxu0 0
        %660 = vmatprep.subr.bf16.mxu0 0
        %661 = vmatpush1.bf16.msra.mxu0 0
        %662 = vmatprep.mubr.bf16.mxu0 0
        %663 = vmatmul.mubr.bf16.gmra.mrb[0].mxu0 %v624
        %v664 = vpop.f32.mrb[0].mxu0
        %v665 = vadd.f32 0.0, %v664
        %v666 = vpop.f32.mrb[0].mxu0
        %v667 = vpop.f32.mrb[0].mxu0
        %v668 = vpop.f32.mrb[0].mxu0
        %669 = vdwg.mxu0
        %671 = vrot.lane.b32.xlu0 %v559, 96
        %v672 = vpop.permute.xlu0 %671
        %674 = vrot.lane.b32.xlu0 %v560, 96
        %v675 = vpop.permute.xlu0 %674
        %v677 = vsel %vm562, %v672, 0
        %v680 = vsel %vm562, %v675, 0
        %682 = vmatprep.subr.bf16.mxu0 0
        %683 = vmatpush1.bf16.xpose.msra.mxu0 %v680
        %684 = vmatprep.subr.bf16.mxu0 0
        %685 = vmatpush1.bf16.xpose.msra.mxu0 0
        %686 = vmatprep.subr.bf16.mxu0 0
        %687 = vmatpush1.bf16.xpose.msra.mxu0 0
        %688 = vmatprep.subr.bf16.mxu0 0
        %689 = vmatpush1.bf16.xpose.msra.mxu0 0
        %690 = vmatprep.subr.bf16.mxu0 0
        %691 = vmatpush1.bf16.xpose.msra.mxu0 0
        %692 = vmatprep.subr.bf16.mxu0 0
        %693 = vmatpush1.bf16.xpose.msra.mxu0 0
        %694 = vmatprep.subr.bf16.mxu0 0
        %695 = vmatpush1.bf16.xpose.msra.mxu0 0
        %696 = vmatprep.subr.bf16.mxu0 0
        %697 = vmatpush1.bf16.xpose.msra.mxu0 0
        %698 = vmatprep.subr.bf16.mxu0 0
        %699 = vmatpush1.bf16.xpose.msra.mxu0 0
        %700 = vmatprep.subr.bf16.mxu0 0
        %701 = vmatpush1.bf16.xpose.msra.mxu0 0
        %702 = vmatprep.subr.bf16.mxu0 0
        %703 = vmatpush1.bf16.xpose.msra.mxu0 0
        %704 = vmatprep.subr.bf16.mxu0 0
        %705 = vmatpush1.bf16.xpose.msra.mxu0 0
        %706 = vmatprep.subr.bf16.mxu0 0
        %707 = vmatpush1.bf16.xpose.msra.mxu0 0
        %708 = vmatprep.subr.bf16.mxu0 0
        %709 = vmatpush1.bf16.xpose.msra.mxu0 0
        %710 = vmatprep.subr.bf16.mxu0 0
        %711 = vmatpush1.bf16.xpose.msra.mxu0 0
        %712 = vmatprep.subr.bf16.mxu0 0
        %713 = vmatpush1.bf16.xpose.msra.mxu0 0
        %714 = vmatprep.mubr.bf16.mxu0 0
        %715 = vmatmul.mubr.bf16.gmra.mrb[0].mxu0 %v677
        %v716 = vpop.f32.mrb[0].mxu0
        %v717 = vadd.f32 0.0, %v716
        %v718 = vpop.f32.mrb[0].mxu0
        %v719 = vpop.f32.mrb[0].mxu0
        %v720 = vpop.f32.mrb[0].mxu0
        %721 = vdwg.mxu0
        %v722 = vsel %vm558, %v717, -1e+30
        %v723 = vsel %vm610, %v722, -inf
        %724 = vmax.xlane.f32.xlu0 %v723
        %v725 = vpop.xlane.xlu0 %724
        %v726 = vsub.f32 %v722, %v725
        %v727 = vmul.f32 %v726, 1.442695
        %v728 = vpow.pop %v727
        %v729 = vsel %vm610, %v728, 0.0
        %730 = vadd.xlane.f32.xlu0 %v729
        %v731 = vpop.xlane.xlu0 %730
        %v732 = vrcp.pop %v731
        %v733 = vmul.f32 %v728, %v732
        %v734 = vpack.c.bf16 %v733, %v733
        %736 = vrot.lane.b32.xlu0 %v561, 96
        %v737 = vpop.permute.xlu0 %736
        %v739 = vsel %vm610, %v734, 0
        %v742 = vsel %vm626, %v737, 0
        %744 = vmatprep.subr.bf16.mxu0 0
        %745 = vmatpush1.bf16.msra.mxu0 %v742
        %746 = vmatprep.subr.bf16.mxu0 0
        %747 = vmatpush1.bf16.msra.mxu0 0
        %748 = vmatprep.subr.bf16.mxu0 0
        %749 = vmatpush1.bf16.msra.mxu0 0
        %750 = vmatprep.subr.bf16.mxu0 0
        %751 = vmatpush1.bf16.msra.mxu0 0
        %752 = vmatprep.subr.bf16.mxu0 0
        %753 = vmatpush1.bf16.msra.mxu0 0
        %754 = vmatprep.subr.bf16.mxu0 0
        %755 = vmatpush1.bf16.msra.mxu0 0
        %756 = vmatprep.subr.bf16.mxu0 0
        %757 = vmatpush1.bf16.msra.mxu0 0
        %758 = vmatprep.subr.bf16.mxu0 0
        %759 = vmatpush1.bf16.msra.mxu0 0
        %760 = vmatprep.subr.bf16.mxu0 0
        %761 = vmatpush1.bf16.msra.mxu0 0
        %762 = vmatprep.subr.bf16.mxu0 0
        %763 = vmatpush1.bf16.msra.mxu0 0
        %764 = vmatprep.subr.bf16.mxu0 0
        %765 = vmatpush1.bf16.msra.mxu0 0
        %766 = vmatprep.subr.bf16.mxu0 0
        %767 = vmatpush1.bf16.msra.mxu0 0
        %768 = vmatprep.subr.bf16.mxu0 0
        %769 = vmatpush1.bf16.msra.mxu0 0
        %770 = vmatprep.subr.bf16.mxu0 0
        %771 = vmatpush1.bf16.msra.mxu0 0
        %772 = vmatprep.subr.bf16.mxu0 0
        %773 = vmatpush1.bf16.msra.mxu0 0
        %774 = vmatprep.subr.bf16.mxu0 0
        %775 = vmatpush1.bf16.msra.mxu0 0
        %776 = vmatprep.mubr.bf16.mxu0 0
        %777 = vmatmul.mubr.bf16.gmra.mrb[0].mxu0 %v739
        %v778 = vpop.f32.mrb[0].mxu0
        %v779 = vadd.f32 0.0, %v778
        %v780 = vpop.f32.mrb[0].mxu0
        %v781 = vpop.f32.mrb[0].mxu0
        %v782 = vpop.f32.mrb[0].mxu0
        %783 = vdwg.mxu0
        %784 = vrot.lane.b32.xlu0 %v559, 64
        %v785 = vpop.permute.xlu0 %784
        %786 = vrot.lane.b32.xlu0 %v560, 64
        %v787 = vpop.permute.xlu0 %786
        %v789 = vsel %vm562, %v785, 0
        %v792 = vsel %vm562, %v787, 0
        %794 = vmatprep.subr.bf16.mxu0 0
        %795 = vmatpush1.bf16.xpose.msra.mxu0 %v792
        %796 = vmatprep.subr.bf16.mxu0 0
        %797 = vmatpush1.bf16.xpose.msra.mxu0 0
        %798 = vmatprep.subr.bf16.mxu0 0
        %799 = vmatpush1.bf16.xpose.msra.mxu0 0
        %800 = vmatprep.subr.bf16.mxu0 0
        %801 = vmatpush1.bf16.xpose.msra.mxu0 0
        %802 = vmatprep.subr.bf16.mxu0 0
        %803 = vmatpush1.bf16.xpose.msra.mxu0 0
        %804 = vmatprep.subr.bf16.mxu0 0
        %805 = vmatpush1.bf16.xpose.msra.mxu0 0
        %806 = vmatprep.subr.bf16.mxu0 0
        %807 = vmatpush1.bf16.xpose.msra.mxu0 0
        %808 = vmatprep.subr.bf16.mxu0 0
        %809 = vmatpush1.bf16.xpose.msra.mxu0 0
        %810 = vmatprep.subr.bf16.mxu0 0
        %811 = vmatpush1.bf16.xpose.msra.mxu0 0
        %812 = vmatprep.subr.bf16.mxu0 0
        %813 = vmatpush1.bf16.xpose.msra.mxu0 0
        %814 = vmatprep.subr.bf16.mxu0 0
        %815 = vmatpush1.bf16.xpose.msra.mxu0 0
        %816 = vmatprep.subr.bf16.mxu0 0
        %817 = vmatpush1.bf16.xpose.msra.mxu0 0
        %818 = vmatprep.subr.bf16.mxu0 0
        %819 = vmatpush1.bf16.xpose.msra.mxu0 0
        %820 = vmatprep.subr.bf16.mxu0 0
        %821 = vmatpush1.bf16.xpose.msra.mxu0 0
        %822 = vmatprep.subr.bf16.mxu0 0
        %823 = vmatpush1.bf16.xpose.msra.mxu0 0
        %824 = vmatprep.subr.bf16.mxu0 0
        %825 = vmatpush1.bf16.xpose.msra.mxu0 0
        %826 = vmatprep.mubr.bf16.mxu0 0
        %827 = vmatmul.mubr.bf16.gmra.mrb[0].mxu0 %v789
        %v828 = vpop.f32.mrb[0].mxu0
        %v829 = vadd.f32 0.0, %v828
        %v830 = vpop.f32.mrb[0].mxu0
        %v831 = vpop.f32.mrb[0].mxu0
        %v832 = vpop.f32.mrb[0].mxu0
        %833 = vdwg.mxu0
        %v834 = vsel %vm558, %v829, -1e+30
        %v835 = vsel %vm610, %v834, -inf
        %836 = vmax.xlane.f32.xlu0 %v835
        %v837 = vpop.xlane.xlu0 %836
        %v838 = vsub.f32 %v834, %v837
        %v839 = vmul.f32 %v838, 1.442695
        %v840 = vpow.pop %v839
        %v841 = vsel %vm610, %v840, 0.0
        %842 = vadd.xlane.f32.xlu0 %v841
        %v843 = vpop.xlane.xlu0 %842
        %v844 = vrcp.pop %v843
        %v845 = vmul.f32 %v840, %v844
        %v846 = vpack.c.bf16 %v845, %v845
        %847 = vrot.lane.b32.xlu0 %v561, 64
        %v848 = vpop.permute.xlu0 %847
        %v850 = vsel %vm610, %v846, 0
        %v853 = vsel %vm626, %v848, 0
        %855 = vmatprep.subr.bf16.mxu0 0
        %856 = vmatpush1.bf16.msra.mxu0 %v853
        %857 = vmatprep.subr.bf16.mxu0 0
        %858 = vmatpush1.bf16.msra.mxu0 0
        %859 = vmatprep.subr.bf16.mxu0 0
        %860 = vmatpush1.bf16.msra.mxu0 0
        %861 = vmatprep.subr.bf16.mxu0 0
        %862 = vmatpush1.bf16.msra.mxu0 0
        %863 = vmatprep.subr.bf16.mxu0 0
        %864 = vmatpush1.bf16.msra.mxu0 0
        %865 = vmatprep.subr.bf16.mxu0 0
        %866 = vmatpush1.bf16.msra.mxu0 0
        %867 = vmatprep.subr.bf16.mxu0 0
        %868 = vmatpush1.bf16.msra.mxu0 0
        %869 = vmatprep.subr.bf16.mxu0 0
        %870 = vmatpush1.bf16.msra.mxu0 0
        %871 = vmatprep.subr.bf16.mxu0 0
        %872 = vmatpush1.bf16.msra.mxu0 0
        %873 = vmatprep.subr.bf16.mxu0 0
        %874 = vmatpush1.bf16.msra.mxu0 0
        %875 = vmatprep.subr.bf16.mxu0 0
        %876 = vmatpush1.bf16.msra.mxu0 0
        %877 = vmatprep.subr.bf16.mxu0 0
        %878 = vmatpush1.bf16.msra.mxu0 0
        %879 = vmatprep.subr.bf16.mxu0 0
        %880 = vmatpush1.bf16.msra.mxu0 0
        %881 = vmatprep.subr.bf16.mxu0 0
        %882 = vmatpush1.bf16.msra.mxu0 0
        %883 = vmatprep.subr.bf16.mxu0 0
        %884 = vmatpush1.bf16.msra.mxu0 0
        %885 = vmatprep.subr.bf16.mxu0 0
        %886 = vmatpush1.bf16.msra.mxu0 0
        %887 = vmatprep.mubr.bf16.mxu0 0
        %888 = vmatmul.mubr.bf16.gmra.mrb[0].mxu0 %v850
        %v889 = vpop.f32.mrb[0].mxu0
        %v890 = vadd.f32 0.0, %v889
        %v891 = vpop.f32.mrb[0].mxu0
        %v892 = vpop.f32.mrb[0].mxu0
        %v893 = vpop.f32.mrb[0].mxu0
        %894 = vdwg.mxu0
        %895 = vrot.lane.b32.xlu0 %v559, 32
        %v896 = vpop.permute.xlu0 %895
        %897 = vrot.lane.b32.xlu0 %v560, 32
        %v898 = vpop.permute.xlu0 %897
        %v900 = vsel %vm562, %v896, 0
        %v903 = vsel %vm562, %v898, 0
        %905 = vmatprep.subr.bf16.mxu0 0
        %906 = vmatpush1.bf16.xpose.msra.mxu0 %v903
        %907 = vmatprep.subr.bf16.mxu0 0
        %908 = vmatpush1.bf16.xpose.msra.mxu0 0
        %909 = vmatprep.subr.bf16.mxu0 0
        %910 = vmatpush1.bf16.xpose.msra.mxu0 0
        %911 = vmatprep.subr.bf16.mxu0 0
        %912 = vmatpush1.bf16.xpose.msra.mxu0 0
        %913 = vmatprep.subr.bf16.mxu0 0
        %914 = vmatpush1.bf16.xpose.msra.mxu0 0
        %915 = vmatprep.subr.bf16.mxu0 0
        %916 = vmatpush1.bf16.xpose.msra.mxu0 0
        %917 = vmatprep.subr.bf16.mxu0 0
        %918 = vmatpush1.bf16.xpose.msra.mxu0 0
        %919 = vmatprep.subr.bf16.mxu0 0
        %920 = vmatpush1.bf16.xpose.msra.mxu0 0
        %921 = vmatprep.subr.bf16.mxu0 0
        %922 = vmatpush1.bf16.xpose.msra.mxu0 0
        %923 = vmatprep.subr.bf16.mxu0 0
        %924 = vmatpush1.bf16.xpose.msra.mxu0 0
        %925 = vmatprep.subr.bf16.mxu0 0
        %926 = vmatpush1.bf16.xpose.msra.mxu0 0
        %927 = vmatprep.subr.bf16.mxu0 0
        %928 = vmatpush1.bf16.xpose.msra.mxu0 0
        %929 = vmatprep.subr.bf16.mxu0 0
        %930 = vmatpush1.bf16.xpose.msra.mxu0 0
        %931 = vmatprep.subr.bf16.mxu0 0
        %932 = vmatpush1.bf16.xpose.msra.mxu0 0
        %933 = vmatprep.subr.bf16.mxu0 0
        %934 = vmatpush1.bf16.xpose.msra.mxu0 0
        %935 = vmatprep.subr.bf16.mxu0 0
        %936 = vmatpush1.bf16.xpose.msra.mxu0 0
        %937 = vmatprep.mubr.bf16.mxu0 0
        %938 = vmatmul.mubr.bf16.gmra.mrb[0].mxu0 %v900
        %v939 = vpop.f32.mrb[0].mxu0
        %v940 = vadd.f32 0.0, %v939
        %v941 = vpop.f32.mrb[0].mxu0
        %v942 = vpop.f32.mrb[0].mxu0
        %v943 = vpop.f32.mrb[0].mxu0
        %944 = vdwg.mxu0
        %v945 = vsel %vm558, %v940, -1e+30
        %v946 = vsel %vm610, %v945, -inf
        %947 = vmax.xlane.f32.xlu0 %v946
        %v948 = vpop.xlane.xlu0 %947
        %v949 = vsub.f32 %v945, %v948
        %v950 = vmul.f32 %v949, 1.442695
        %v951 = vpow.pop %v950
        %v952 = vsel %vm610, %v951, 0.0
        %953 = vadd.xlane.f32.xlu0 %v952
        %v954 = vpop.xlane.xlu0 %953
        %v955 = vrcp.pop %v954
        %v956 = vmul.f32 %v951, %v955
        %v957 = vpack.c.bf16 %v956, %v956
        %958 = vrot.lane.b32.xlu0 %v561, 32
        %v959 = vpop.permute.xlu0 %958
        %v961 = vsel %vm610, %v957, 0
        %v964 = vsel %vm626, %v959, 0
        %966 = vmatprep.subr.bf16.mxu0 0
        %967 = vmatpush1.bf16.msra.mxu0 %v964
        %968 = vmatprep.subr.bf16.mxu0 0
        %969 = vmatpush1.bf16.msra.mxu0 0
        %970 = vmatprep.subr.bf16.mxu0 0
        %971 = vmatpush1.bf16.msra.mxu0 0
        %972 = vmatprep.subr.bf16.mxu0 0
        %973 = vmatpush1.bf16.msra.mxu0 0
        %974 = vmatprep.subr.bf16.mxu0 0
        %975 = vmatpush1.bf16.msra.mxu0 0
        %976 = vmatprep.subr.bf16.mxu0 0
        %977 = vmatpush1.bf16.msra.mxu0 0
        %978 = vmatprep.subr.bf16.mxu0 0
        %979 = vmatpush1.bf16.msra.mxu0 0
        %980 = vmatprep.subr.bf16.mxu0 0
        %981 = vmatpush1.bf16.msra.mxu0 0
        %982 = vmatprep.subr.bf16.mxu0 0
        %983 = vmatpush1.bf16.msra.mxu0 0
        %984 = vmatprep.subr.bf16.mxu0 0
        %985 = vmatpush1.bf16.msra.mxu0 0
        %986 = vmatprep.subr.bf16.mxu0 0
        %987 = vmatpush1.bf16.msra.mxu0 0
        %988 = vmatprep.subr.bf16.mxu0 0
        %989 = vmatpush1.bf16.msra.mxu0 0
        %990 = vmatprep.subr.bf16.mxu0 0
        %991 = vmatpush1.bf16.msra.mxu0 0
        %992 = vmatprep.subr.bf16.mxu0 0
        %993 = vmatpush1.bf16.msra.mxu0 0
        %994 = vmatprep.subr.bf16.mxu0 0
        %995 = vmatpush1.bf16.msra.mxu0 0
        %996 = vmatprep.subr.bf16.mxu0 0
        %997 = vmatpush1.bf16.msra.mxu0 0
        %998 = vmatprep.mubr.bf16.mxu0 0
        %999 = vmatmul.mubr.bf16.gmra.mrb[0].mxu0 %v961
        %v1000 = vpop.f32.mrb[0].mxu0
        %v1001 = vadd.f32 0.0, %v1000
        %v1002 = vpop.f32.mrb[0].mxu0
        %v1003 = vpop.f32.mrb[0].mxu0
        %v1004 = vpop.f32.mrb[0].mxu0
        %1005 = vdwg.mxu0
        %1007 = vrot.lane.b32.xlu0 %v779, 32
        %v1008 = vpop.permute.xlu0 %1007
        %1011 = vrot.lane.b32.xlu0 %v890, 64
        %v1012 = vpop.permute.xlu0 %1011
        %1015 = vrot.lane.b32.xlu0 %v1001, 96
        %v1016 = vpop.permute.xlu0 %1015
        %v1018 = vsel %vm562, %v665, %v1008
        %vm1019 = vcmask 523264
        %v1020 = vsel %vm1019, %v1018, %v1012
        %vm1021 = vcmask 785408
        %v1022 = vsel %vm1021, %v1020, %v1016
        %v1023 = vpack.c.bf16 %v1022, %v1022
        %v1024 = vld [vmem:[#allocation8] sm:$0xf]
        %v1025 = vld [vmem:[#allocation8 + $0x4] sm:$0xf]
        %v1026 = vld [vmem:[#allocation8 + $0x8] sm:$0xf]
        %v1027 = vld [vmem:[#allocation8 + $0xc] sm:$0xf]
        %v1028 = vld [vmem:[#allocation8 + $0x10] sm:$0xf]
        %v1029 = vld [vmem:[#allocation8 + $0x14] sm:$0xf]
        %v1030 = vld [vmem:[#allocation8 + $0x18] sm:$0xf]
        %v1031 = vld [vmem:[#allocation8 + $0x1c] sm:$0xf]
        %v1032 = vld [vmem:[#allocation8 + $0x20] sm:$0xf]
        %v1033 = vld [vmem:[#allocation8 + $0x24] sm:$0xf]
        %v1034 = vld [vmem:[#allocation8 + $0x28] sm:$0xf]
        %v1035 = vld [vmem:[#allocation8 + $0x2c] sm:$0xf]
        %v1036 = vld [vmem:[#allocation8 + $0x30] sm:$0xf]
        %v1037 = vld [vmem:[#allocation8 + $0x34] sm:$0xf]
        %v1038 = vld [vmem:[#allocation8 + $0x38] sm:$0xf]
        %v1039 = vld [vmem:[#allocation8 + $0x3c] sm:$0xf]
        %v1040 = vld [vmem:[#allocation10] sm:$0x1]
        %v1042 = vlaneseq
        %v1043 = vshrl.u32 %v1042, 7
        %v1044 = vsub.s32 0, %v1043
        %v1045 = vrot.slane %v1040, %v1044
        %v1063 = vunpack.c.l.b16 %v1024
        %v1064 = vunpack.c.l.b16 %v1025
        %v1065 = vunpack.c.l.b16 %v1026
        %v1066 = vunpack.c.l.b16 %v1027
        %v1067 = vunpack.c.l.b16 %v1028
        %v1068 = vunpack.c.l.b16 %v1029
        %v1069 = vunpack.c.l.b16 %v1030
        %v1070 = vunpack.c.l.b16 %v1031
        %v1071 = vunpack.c.l.b16 %v1032
        %v1072 = vunpack.c.l.b16 %v1033
        %v1073 = vunpack.c.l.b16 %v1034
        %v1074 = vunpack.c.l.b16 %v1035
        %v1075 = vunpack.c.l.b16 %v1036
        %v1076 = vunpack.c.l.b16 %v1037
        %v1077 = vunpack.c.l.b16 %v1038
        %v1078 = vunpack.c.l.b16 %v1039
        %v1079 = vpack.c.b16 %v1064, %v1063
        %v1080 = vpack.c.b16 %v1066, %v1065
        %v1081 = vpack.c.b16 %v1068, %v1067
        %v1082 = vpack.c.b16 %v1070, %v1069
        %v1083 = vpack.c.b16 %v1072, %v1071
        %v1084 = vpack.c.b16 %v1074, %v1073
        %v1085 = vpack.c.b16 %v1076, %v1075
        %v1086 = vpack.c.b16 %v1078, %v1077
        %1095 = vmatprep.subr.bf16.mxu0 0
        %1096 = vmatpush1.bf16.msra.mxu0 %v1079
        %1097 = vmatprep.subr.bf16.mxu0 0
        %1098 = vmatpush1.bf16.msra.mxu0 %v1080
        %1099 = vmatprep.subr.bf16.mxu0 0
        %1100 = vmatpush1.bf16.msra.mxu0 %v1081
        %1101 = vmatprep.subr.bf16.mxu0 0
        %1102 = vmatpush1.bf16.msra.mxu0 %v1082
        %1103 = vmatprep.subr.bf16.mxu0 0
        %1104 = vmatpush1.bf16.msra.mxu0 %v1083
        %1105 = vmatprep.subr.bf16.mxu0 0
        %1106 = vmatpush1.bf16.msra.mxu0 %v1084
        %1107 = vmatprep.subr.bf16.mxu0 0
        %1108 = vmatpush1.bf16.msra.mxu0 %v1085
        %1109 = vmatprep.subr.bf16.mxu0 0
        %1110 = vmatpush1.bf16.msra.mxu0 %v1086
        %1111 = vmatprep.subr.bf16.mxu0 0
        %1112 = vmatpush1.bf16.msra.mxu0 0
        %1113 = vmatprep.subr.bf16.mxu0 0
        %1114 = vmatpush1.bf16.msra.mxu0 0
        %1115 = vmatprep.subr.bf16.mxu0 0
        %1116 = vmatpush1.bf16.msra.mxu0 0
        %1117 = vmatprep.subr.bf16.mxu0 0
        %1118 = vmatpush1.bf16.msra.mxu0 0
        %1119 = vmatprep.subr.bf16.mxu0 0
        %1120 = vmatpush1.bf16.msra.mxu0 0
        %1121 = vmatprep.subr.bf16.mxu0 0
        %1122 = vmatpush1.bf16.msra.mxu0 0
        %1123 = vmatprep.subr.bf16.mxu0 0
        %1124 = vmatpush1.bf16.msra.mxu0 0
        %1125 = vmatprep.subr.bf16.mxu0 0
        %1126 = vmatpush1.bf16.msra.mxu0 0
        %1127 = vmatprep.mubr.bf16.mxu0 0
        %1128 = vmatmul.mubr.bf16.gmra.mrb[0].mxu0 %v1023
        %v1129 = vpop.f32.mrb[0].mxu0
        %v1130 = vadd.f32 %v1045, %v1129
        %v1131 = vpop.f32.mrb[0].mxu0
        %v1132 = vpop.f32.mrb[0].mxu0
        %v1133 = vpop.f32.mrb[0].mxu0
        %1134 = vdwg.mxu0
        %v1135 = vpack.c.bf16 %v1130, %v1130
        %1136 = vst [vmem:[%s293] sm:$0xf] %v1135
        %s1137 = sand.u32 %s142, 1
        %s1138 = scalar_lea.sflag [#allocation4], %s1137
        %s1139 = sand.u32 %s142, 1
        %s1140 = smul.addr %s1139, 4
        %s1141 = scalar_lea.vmem [#allocation11], %s1140
        // Predicated region
        $region61: #{tpu_custom_call.1} parent=39 // pred_check
          %p1142 = pneg %p152
        $region62: #{tpu_custom_call.1} parent=39 // pred_check_branch
          %1144 = sbr.rel (%p1142) target = $region64
        $region63: #{tpu_custom_call.1} parent=39 // pred_region
          %s1146 = ssub.s32 64, 64
          %1147 = vsyncadd %s1138, %s1146
          %s1148 = smul.addr %s24, 64
          %s1149 = scalar_lea.hbm %s5, %s1148
          %s1151 = sshll.u32 %s1141, 4
          %s1152 = int_to_ptr.vmem [resolvable:$true] %s1151
          %1154 = dma.vmem_to_hbm [thread:$0]  %s1152, 64, %s1149, %s1138
        $region64: #{tpu_custom_call.1} parent=39 // pred_fallthru
          _
      $region40: #{tpu_custom_call.1} parent=5 // pred_fallthru
        _
      %p1155 = scmp.le.s32.totalorder 2, %s19
      // Predicated region
      $region65: #{tpu_custom_call.1} parent=5 // pred_check
        %p1156 = pneg %p1155
      $region66: #{tpu_custom_call.1} parent=5 // pred_check_branch
        %1158 = sbr.rel (%p1156) target = $region68
      $region67: #{tpu_custom_call.1} parent=5 // pred_region
        %s1159 = ssub.s32 %s19, 2
        // Predicated region
        $region69: #{tpu_custom_call.1} parent=67 // pred_check
          %p1160 = pneg %p158
        $region70: #{tpu_custom_call.1} parent=67 // pred_check_branch
          %1162 = sbr.rel (%p1160) target = $region72
        $region71: #{tpu_custom_call.1} parent=67 // pred_region
          %s1163 = sand.u32 %s143, 1
          %s1164 = scalar_lea.sflag [#allocation4], %s1163
          %s1165 = sand.u32 %s143, 1
          %s1166 = smul.addr %s1165, 4
          %s1167 = scalar_lea.vmem [#allocation11], %s1166
          %1168 = dma.done %s1164, 64
        $region72: #{tpu_custom_call.1} parent=67 // pred_fallthru
          _
      $region68: #{tpu_custom_call.1} parent=5 // pred_fallthru
        _
    $region6: #{tpu_custom_call.1} parent=1 // loop_footer
      %s23 = sadd.s32 1, %s19
    $region7: #{tpu_custom_call.1} parent=1 // loop_footer_branch
      %18 = sbr.rel target = $region3
    $region8: #{tpu_custom_call.1} parent=1 // loop_exit
      _
    %1169 = vsyncpa [#allocation3], 1
    %s1170 = scalar_lea.sflag [#allocation3], 1
    %1171 = vsyncpa %s1170, 1
    %1172 = vsyncpa [#allocation6], 1
    %1173 = vsyncpa [#allocation9], 1
    %1174 = vsyncpa [#allocation4], 1
    %s1175 = scalar_lea.sflag [#allocation4], 1
    %1176 = vsyncpa %s1175, 1

</llo_original>
